<compile_context>
chip_gen: v7x
topology: tpu7x:2x2x1
jax: 0.10.0
libtpu: 0.0.40
codegen_flags: <defaults>
</compile_context>

<pallas_src>
import functools

import numpy as np
import jax
import jax.numpy as jnp
from jax.experimental import pallas as pl
from jax.experimental.pallas import tpu as pltpu


def _cdiv(a, b):
    return -(-a // b)


def _round_up(a, m):
    return _cdiv(a, m) * m


# ----------------------------------------------------------------------------
# One-time parameter preprocessing (host / plain JAX — NOT in the hot path)
# ----------------------------------------------------------------------------
def _conv2d_as_dense(w, b, in_shape):
    """Dense GEMM form of nn.Conv2d (OIHW weights, NCHW data, VALID, stride 1).

    Returns (M, b_vec, out_shape) with flatten_CHW(conv2d(x)) == flatten_CHW(x) @ M + b_vec.
    """
    w = np.asarray(w, dtype=np.float32)
    b = np.asarray(b, dtype=np.float32)
    c_out, c_in, kh, kw = w.shape
    _, h, wd = in_shape
    ho, wo = h - kh + 1, wd - kw + 1
    m = np.zeros((c_in, h, wd, c_out, ho, wo), dtype=np.float32)
    for ky in range(kh):
        for kx in range(kw):
            wt = w[:, :, ky, kx].T  # (c_in, c_out)
            for i in range(ho):
                for j in range(wo):
                    m[:, i + ky, j + kx, :, i, j] += wt
    m = m.reshape(c_in * h * wd, c_out * ho * wo)
    b_vec = np.broadcast_to(b[:, None, None], (c_out, ho, wo)).reshape(-1).copy()
    return jnp.asarray(m), jnp.asarray(b_vec), (c_out, ho, wo)


def init_params(key, input_dim, out_dim, hidden_dim=64):
    """Deterministic synthetic params, PyTorch-default-style uniform(-1/sqrt(fan_in))."""
    c, h, w = input_dim
    obs_dim_fl = c * h * w
    cnn_out_dim = 8 * (h - 2) * (w - 2)
    fc1_in = obs_dim_fl + cnn_out_dim

    def unif(k, shape, fan_in):
        bound = 1.0 / np.sqrt(fan_in)
        return jax.random.uniform(k, shape, jnp.float32, -bound, bound)

    ks = jax.random.split(key, 12)
    return dict(
        cnn1_w=unif(ks[0], (8, c, 2, 2), c * 4),
        cnn1_b=unif(ks[1], (8,), c * 4),
        cnn2_w=unif(ks[2], (8, 8, 2, 2), 8 * 4),
        cnn2_b=unif(ks[3], (8,), 8 * 4),
        fc1_w=unif(ks[4], (hidden_dim, fc1_in), fc1_in),
        fc1_b=unif(ks[5], (hidden_dim,), fc1_in),
        fc2_w=unif(ks[6], (hidden_dim, hidden_dim), hidden_dim),
        fc2_b=unif(ks[7], (hidden_dim,), hidden_dim),
        fc3_w=unif(ks[8], (hidden_dim, hidden_dim), hidden_dim),
        fc3_b=unif(ks[9], (hidden_dim,), hidden_dim),
        fc4_w=unif(ks[10], (out_dim, hidden_dim), hidden_dim),
        fc4_b=unif(ks[11], (out_dim,), hidden_dim),
    )


def prepare_params(params, input_dim, use_bf16=True):
    """Pack weights into kernel-ready form. Run ONCE per parameter set."""
    c, h, w = input_dim
    obs_dim_fl = c * h * w

    m1, bc1, s1 = _conv2d_as_dense(params["cnn1_w"], params["cnn1_b"], (c, h, w))
    m2, bc2, _ = _conv2d_as_dense(params["cnn2_w"], params["cnn2_b"], s1)
    c1o = int(m1.shape[1])                       # conv1 flat output dim (240)
    c2o = int(m2.shape[1])                       # conv2 flat output dim (160)

    # PyTorch Linear computes x @ W.T + b -> store W.T; split fc1 into X / conv parts.
    w1t = jnp.asarray(params["fc1_w"], jnp.float32).T
    w1x, w1c = w1t[:obs_dim_fl, :], w1t[obs_dim_fl:, :]
    w2t = jnp.asarray(params["fc2_w"], jnp.float32).T
    w3t = jnp.asarray(params["fc3_w"], jnp.float32).T
    w4t = jnp.asarray(params["fc4_w"], jnp.float32).T            # (hidden, out_dim)
    hidden, out_dim = w4t.shape

    # Fuse [conv1-as-GEMM | fc1 x-part] into one x-dot.  conv1 columns are zero-padded
    # to a lane-tile multiple (128) so the in-kernel column split is lane-aligned (no
    # XLU shuffles).  Padded cols stay 0 through bias+ReLU and hit zero rows of the
    # padded m2, so the fusion is numerically exact.
    conv1_cols = max(128, _round_up(c1o, 128))                   # 240 -> 256
    wf = jnp.zeros((obs_dim_fl, conv1_cols + hidden), jnp.float32)
    wf = wf.at[:, :c1o].set(m1).at[:, conv1_cols:].set(w1x)
    bc1p = jnp.zeros((1, conv1_cols), jnp.float32).at[0, :c1o].set(bc1)
    m2p = jnp.zeros((conv1_cols, c2o), jnp.float32).at[:c1o, :].set(m2)

    # Lane-dense output: pad fc4 columns to a multiple of 128 with zeros.
    out_pad = max(128, _round_up(out_dim, 128))
    w4p = jnp.zeros((hidden, out_pad), jnp.float32).at[:, :out_dim].set(w4t)
    b4p = jnp.zeros((1, out_pad), jnp.float32).at[0, :out_dim].set(
        jnp.asarray(params["fc4_b"], jnp.float32))

    op = jnp.bfloat16 if use_bf16 else jnp.float32
    packed = dict(
        # wide MXU operands (conv path / fused fc1-x) in op dtype
        wf=wf.astype(op), m2=m2p.astype(op), w1c=w1c.astype(op),
        # narrow post-conv fcs stay f32 (activations stay f32; MXU is never the
        # saturated slot for these tiny 64-wide GEMMs)
        w2=w2t, w3=w3t, w4=w4p,
        # biases stay f32 (accumulate / bias-add / ReLU path is f32)
        bc1=bc1p, bc2=bc2.reshape(1, -1),
        b1=jnp.asarray(params["fc1_b"], jnp.float32).reshape(1, -1),
        b2=jnp.asarray(params["fc2_b"], jnp.float32).reshape(1, -1),
        b3=jnp.asarray(params["fc3_b"], jnp.float32).reshape(1, -1),
        b4=b4p,
    )
    meta = dict(out_dim=int(out_dim), out_pad=int(out_pad),
                conv1_cols=int(conv1_cols), use_bf16=bool(use_bf16))
    return packed, meta


# ----------------------------------------------------------------------------
# Pallas kernel: entire forward for one batch tile (weights VMEM-resident)
# ----------------------------------------------------------------------------
def _mlp_cnn_kernel(x_ref, wf_ref, bc1_ref, m2_ref, bc2_ref, w1c_ref, b1_ref,
                    w2_ref, b2_ref, w3_ref, b3_ref, w4_ref, b4_ref, out_ref,
                    *, conv1_cols):
    cdt = wf_ref.dtype                    # MXU operand dtype (bf16 fast / f32 exact)
    # x is DMA'd as f32; cast on the VPU here (no wrapper-side HBM round trip).
    x = x_ref[...].astype(cdt)            # (TILE_N, obs_dim_fl)

    # Fused [conv1-as-GEMM | fc1 x-part]: a single x push through the MXU.
    t = jnp.dot(x, wf_ref[...], preferred_element_type=jnp.float32)   # (TILE_N, conv1_cols+hidden)
    h = jnp.maximum(t[:, :conv1_cols] + bc1_ref[...], 0.0)            # conv1 act (pad cols stay 0)
    fc1_x = t[:, conv1_cols:]                                         # x @ W1x partial (f32)

    # conv2-as-GEMM + ReLU (padded rows of m2 are zero -> exact)
    h = jnp.maximum(
        jnp.dot(h.astype(cdt), m2_ref[...], preferred_element_type=jnp.float32)
        + bc2_ref[...], 0.0)                                           # (TILE_N, cnn_out_dim)

    # fc1 on concat([x_flat, conv_features]) == fc1_x + h @ W1c + b1  (exact).
    # Narrow 64-wide activations stay f32 (skip bf16 pack/store; MXU has slack here).
    f = jnp.maximum(fc1_x
                    + jnp.dot(h.astype(cdt), w1c_ref[...],
                              preferred_element_type=jnp.float32)
                    + b1_ref[...], 0.0)
    f = jnp.maximum(jnp.dot(f, w2_ref[...], preferred_element_type=jnp.float32)
                    + b2_ref[...], 0.0)
    f = jnp.maximum(jnp.dot(f, w3_ref[...], preferred_element_type=jnp.float32)
                    + b3_ref[...], 0.0)
    # out_fn is identity (constrain_out=False default); store lane-padded output
    # in the output dtype (bf16 on the fast path halves the dominant writeback).
    out_ref[...] = (jnp.dot(f, w4_ref[...], preferred_element_type=jnp.float32)
                    + b4_ref[...]).astype(out_ref.dtype)


# ----------------------------------------------------------------------------
# Tiling / feature probing helpers
# ----------------------------------------------------------------------------
_MAX_TILE_N = 512   # keeps padding waste low (<3% at batch 2500) and per-tile f32
                    # intermediates ~0.7 MB; per-step overhead (~0.35 us) is negligible.
                    # TODO(synk): on v5e/v6e (128 MiB VMEM) very large batches (>=8-16K
                    # rows) could use tile_n up to 2048; kept uniform here for v7x's 64 MiB.


def _choose_tiling(n):
    """Return (tile_n, num_tiles). tile_n is a multiple of 16; when the grid has more
    than one step the tile count is rounded up to an even number so the "parallel"
    batch axis splits evenly across v7x's two TensorCores (no-op on 1-TC v5e/v6e)."""
    n16 = max(16, _round_up(n, 16))
    if n16 <= _MAX_TILE_N:
        return n16, 1
    num_tiles = _cdiv(n, _MAX_TILE_N)
    if num_tiles % 2:
        num_tiles += 1
    tile_n = _round_up(_cdiv(n, num_tiles), 16)
    return tile_n, num_tiles


def _probe_kernel(x_ref, o_ref):
    o_ref[...] = x_ref[...]


@functools.lru_cache(maxsize=None)
def _single_buffer_weights_supported():
    """True if BlockSpec(pipeline_mode=pl.Buffered(1)) compiles & runs here.

    Single-buffering the constant-index (VMEM-resident) weight blocks reclaims the
    redundant second pipeline buffer; probed once so older jax versions silently
    fall back to the default double-buffered specs instead of failing."""
    try:
        out = pl.pallas_call(
            _probe_kernel,
            out_shape=jax.ShapeDtypeStruct((16, 128), jnp.float32),
            grid=(2,),
            in_specs=[pl.BlockSpec((8, 128), lambda i: (0, 0),
                                   pipeline_mode=pl.Buffered(1))],
            out_specs=pl.BlockSpec((8, 128), lambda i: (i, 0)),
        )(jnp.ones((8, 128), jnp.float32))
        jax.block_until_ready(out)
        return True
    except Exception:
        return False


# ----------------------------------------------------------------------------
# Jitted forward wrapper: batch grid, resident weights, lane-dense output
# ----------------------------------------------------------------------------
@functools.partial(jax.jit,
                   static_argnames=("out_dim", "out_pad", "use_bf16",
                                    "conv1_cols", "single_buffer_weights"))
def _forward_jit(packed, x_nchw, *, out_dim, out_pad, use_bf16, conv1_cols,
                 single_buffer_weights):
    n = x_nchw.shape[0]
    obs_dim_fl = int(np.prod(x_nchw.shape[1:]))

    # NCHW flatten == torch X.reshape(-1, obs_dim_fl). Kept in f32: the bf16 cast
    # (fast path) happens inside the kernel on the VPU.
    x_flat = x_nchw.reshape(n, obs_dim_fl).astype(jnp.float32)

    tile_n, num_tiles = _choose_tiling(n)
    n_pad = tile_n * num_tiles
    if n_pad != n:
        x_flat = jnp.pad(x_flat, ((0, n_pad - n), (0, 0)))

    args = (x_flat,
            packed["wf"], packed["bc1"], packed["m2"], packed["bc2"],
            packed["w1c"], packed["b1"], packed["w2"], packed["b2"],
            packed["w3"], packed["b3"], packed["w4"], packed["b4"])

    # Weights/biases: full-extent, constant-index -> VMEM-resident across grid steps.
    if single_buffer_weights:
        def wspec(shape):
            return pl.BlockSpec(shape, lambda i: (0, 0), pipeline_mode=pl.Buffered(1))
    else:
        def wspec(shape):
            return pl.BlockSpec(shape, lambda i: (0, 0))

    in_specs = [pl.BlockSpec((tile_n, obs_dim_fl), lambda i: (i, 0))]
    in_specs += [wspec(a.shape) for a in args[1:]]
    out_dtype = jnp.bfloat16 if use_bf16 else jnp.float32
    out_specs = pl.BlockSpec((tile_n, out_pad), lambda i: (i, 0))

    # Advisory cost estimate for XLA's scheduler.
    hidden = packed["w2"].shape[0]
    c2o = packed["m2"].shape[1]
    flops = 2 * n_pad * (obs_dim_fl * (conv1_cols + hidden) + conv1_cols * c2o
                         + c2o * hidden + 2 * hidden * hidden + hidden * out_pad)
    bytes_accessed = (sum(int(np.prod(a.shape)) * a.dtype.itemsize for a in args)
                      + n_pad * out_pad * jnp.dtype(out_dtype).itemsize)

    kernel = functools.partial(_mlp_cnn_kernel, conv1_cols=conv1_cols)

    out_padded = pl.pallas_call(
        kernel,
        out_shape=jax.ShapeDtypeStruct((n_pad, out_pad), out_dtype),
        grid_spec=pltpu.PrefetchScalarGridSpec(
            num_scalar_prefetch=0,
            grid=(num_tiles,),
            in_specs=in_specs,
            out_specs=out_specs,
        ),
        compiler_params=pltpu.CompilerParams(
            dimension_semantics=("parallel",),      # megacore sharding on v7x
            vmem_limit_bytes=32 * 1024 * 1024,
        ),
        cost_estimate=pl.CostEstimate(
            flops=int(flops), transcendentals=0, bytes_accessed=int(bytes_accessed)),
    )(*args)

    return out_padded[:n, :out_dim]


def mlp_cnn_forward(packed, meta, x_nchw):
    return _forward_jit(
        packed, x_nchw,
        out_dim=meta["out_dim"], out_pad=meta["out_pad"],
        use_bf16=meta["use_bf16"], conv1_cols=meta["conv1_cols"],
        single_buffer_weights=_single_buffer_weights_supported())


# ----------------------------------------------------------------------------
# Plain-JAX reference (real conv) for correctness checks
# ----------------------------------------------------------------------------
def reference_forward(params, x_nchw):
    dn = ("NCHW", "OIHW", "NCHW")
    h = jax.lax.conv_general_dilated(x_nchw, params["cnn1_w"], (1, 1), "VALID",
                                     dimension_numbers=dn)
    h = jnp.maximum(h + params["cnn1_b"][None, :, None, None], 0.0)
    h = jax.lax.conv_general_dilated(h, params["cnn2_w"], (1, 1), "VALID",
                                     dimension_numbers=dn)
    h = jnp.maximum(h + params["cnn2_b"][None, :, None, None], 0.0)
    n = x_nchw.shape[0]
    feat = jnp.concatenate([x_nchw.reshape(n, -1), h.reshape(n, -1)], axis=1)
    f = jnp.maximum(feat @ params["fc1_w"].T + params["fc1_b"], 0.0)
    f = jnp.maximum(f @ params["fc2_w"].T + params["fc2_b"], 0.0)
    f = jnp.maximum(f @ params["fc3_w"].T + params["fc3_b"], 0.0)
    return f @ params["fc4_w"].T + params["fc4_b"]


if __name__ == "__main__":
    input_dim = (2, 6, 7)          # (C, H, W): two-plane 4-in-a-row board
    batch, hidden_dim, out_dim = 2, 64, 7

    key = jax.random.PRNGKey(0)
    k_x, k_p, k_big = jax.random.split(key, 3)
    x = jax.random.normal(k_x, (batch,) + input_dim, dtype=jnp.float32)
    params = init_params(k_p, input_dim, out_dim, hidden_dim)

    # --- exact f32 path (tight check) ---
    packed_f32, meta_f32 = prepare_params(params, input_dim, use_bf16=False)
    out_f32 = jax.block_until_ready(mlp_cnn_forward(packed_f32, meta_f32, x))
    assert out_f32.shape == (batch, out_dim)
    ref = jax.block_until_ready(reference_forward(params, x))
    np.testing.assert_allclose(np.asarray(out_f32), np.asarray(ref),
                               rtol=1e-4, atol=1e-4)

    # --- bf16-operand / bf16-output fast path (loose check) ---
    packed_bf16, meta_bf16 = prepare_params(params, input_dim, use_bf16=True)
    out_bf16 = jax.block_until_ready(mlp_cnn_forward(packed_bf16, meta_bf16, x))
    np.testing.assert_allclose(np.asarray(out_bf16).astype(np.float32),
                               np.asarray(ref), rtol=5e-2, atol=5e-2)

    # --- exercise the multi-step batch grid (even grid, padded remainder) ---
    x_big = jax.random.normal(k_big, (2500,) + input_dim, dtype=jnp.float32)
    out_big = jax.block_until_ready(mlp_cnn_forward(packed_bf16, meta_bf16, x_big))
    ref_big = jax.block_until_ready(reference_forward(params, x_big))
    np.testing.assert_allclose(np.asarray(out_big).astype(np.float32),
                               np.asarray(ref_big), rtol=5e-2, atol=5e-2)

    print("KERNEL_OK")
</pallas_src>

<mosaic_0001>
module attributes {stable_mosaic.version = 11 : i64} {
  func.func @_probe_kernel(%arg0: i32, %arg1: memref<8x128xf32, #tpu.memory_space<vmem>>, %arg2: memref<8x128xf32, #tpu.memory_space<vmem>>) attributes {dimension_semantics = [#tpu.dimension_semantics<arbitrary>], iteration_bounds = array<i64: 2>, scalar_prefetch = 0 : i64, scratch_operands = 0 : i64, tpu.core_type = #tpu.core_type<tc>, window_params = [{pipeline_mode = #tpu.pipeline_mode<synchronous>, transform_indices = @transform_0, window_bounds = array<i64: 8, 128>}, {transform_indices = @transform_1, window_bounds = array<i64: 8, 128>}]} {
    %c0 = arith.constant 0 : index
    %c0_0 = arith.constant 0 : index
    %0 = vector.load %arg1[%c0, %c0_0] : memref<8x128xf32, #tpu.memory_space<vmem>>, vector<8x128xf32>
    %c0_1 = arith.constant 0 : index
    %c0_2 = arith.constant 0 : index
    %1 = vector.load %arg2[%c0_1, %c0_2] : memref<8x128xf32, #tpu.memory_space<vmem>>, vector<8x128xf32>
    tpu.vector_store %arg2[%c0_1, %c0_2], %0 {strides = array<i32>} : memref<8x128xf32, #tpu.memory_space<vmem>>, vector<8x128xf32>,
    return
  }
  func.func @transform_0(%arg0: i32) -> (i32, i32) {
    %c0_i32 = arith.constant 0 : i32
    %c0_i32_0 = arith.constant 0 : i32
    %c0_i32_1 = arith.constant 0 : i32
    return %c0_i32, %c0_i32_0 : i32, i32
  }
  func.func @transform_1(%arg0: i32) -> (i32, i32) {
    %c0_i32 = arith.constant 0 : i32
    %c0_i32_0 = arith.constant 0 : i32
    return %arg0, %c0_i32 : i32, i32
  }
}

module attributes {stable_mosaic.version = 11 : i64} {
  func.func @_mlp_cnn_kernel(%arg0: i32, %arg1: memref<16x84xf32, #tpu.memory_space<vmem>>, %arg2: memref<84x320xf32, #tpu.memory_space<vmem>>, %arg3: memref<1x256xf32, #tpu.memory_space<vmem>>, %arg4: memref<256x160xf32, #tpu.memory_space<vmem>>, %arg5: memref<1x160xf32, #tpu.memory_space<vmem>>, %arg6: memref<160x64xf32, #tpu.memory_space<vmem>>, %arg7: memref<1x64xf32, #tpu.memory_space<vmem>>, %arg8: memref<64x64xf32, #tpu.memory_space<vmem>>, %arg9: memref<1x64xf32, #tpu.memory_space<vmem>>, %arg10: memref<64x64xf32, #tpu.memory_space<vmem>>, %arg11: memref<1x64xf32, #tpu.memory_space<vmem>>, %arg12: memref<64x128xf32, #tpu.memory_space<vmem>>, %arg13: memref<1x128xf32, #tpu.memory_space<vmem>>, %arg14: memref<16x128xf32, #tpu.memory_space<vmem>>) attributes {dimension_semantics = [#tpu.dimension_semantics<parallel>], iteration_bounds = array<i64: 1>, scalar_prefetch = 0 : i64, scratch_operands = 0 : i64, tpu.core_type = #tpu.core_type<tc>, window_params = [{transform_indices = @transform_0, window_bounds = array<i64: 16, 84>}, {pipeline_mode = #tpu.pipeline_mode<synchronous>, transform_indices = @transform_1, window_bounds = array<i64: 84, 320>}, {pipeline_mode = #tpu.pipeline_mode<synchronous>, transform_indices = @transform_2, window_bounds = array<i64: 1, 256>}, {pipeline_mode = #tpu.pipeline_mode<synchronous>, transform_indices = @transform_3, window_bounds = array<i64: 256, 160>}, {pipeline_mode = #tpu.pipeline_mode<synchronous>, transform_indices = @transform_4, window_bounds = array<i64: 1, 160>}, {pipeline_mode = #tpu.pipeline_mode<synchronous>, transform_indices = @transform_5, window_bounds = array<i64: 160, 64>}, {pipeline_mode = #tpu.pipeline_mode<synchronous>, transform_indices = @transform_6, window_bounds = array<i64: 1, 64>}, {pipeline_mode = #tpu.pipeline_mode<synchronous>, transform_indices = @transform_7, window_bounds = array<i64: 64, 64>}, {pipeline_mode = #tpu.pipeline_mode<synchronous>, transform_indices = @transform_8, window_bounds = array<i64: 1, 64>}, {pipeline_mode = #tpu.pipeline_mode<synchronous>, transform_indices = @transform_9, window_bounds = array<i64: 64, 64>}, {pipeline_mode = #tpu.pipeline_mode<synchronous>, transform_indices = @transform_10, window_bounds = array<i64: 1, 64>}, {pipeline_mode = #tpu.pipeline_mode<synchronous>, transform_indices = @transform_11, window_bounds = array<i64: 64, 128>}, {pipeline_mode = #tpu.pipeline_mode<synchronous>, transform_indices = @transform_12, window_bounds = array<i64: 1, 128>}, {transform_indices = @transform_13, window_bounds = array<i64: 16, 128>}]} {
    %c0 = arith.constant 0 : index
    %c0_0 = arith.constant 0 : index
    %0 = vector.load %arg1[%c0, %c0_0] : memref<16x84xf32, #tpu.memory_space<vmem>>, vector<16x84xf32>
    %c0_1 = arith.constant 0 : index
    %c0_2 = arith.constant 0 : index
    %1 = vector.load %arg2[%c0_1, %c0_2] : memref<84x320xf32, #tpu.memory_space<vmem>>, vector<84x320xf32>
    %cst = arith.constant dense<0.000000e+00> : vector<16x320xf32>
    %2 = tpu.matmul %0, %1, %cst {dimension_numbers = #tpu.dot_dimension_numbers<[1], [0], [0], [1], [0, 0, 1, 1], [], []>} : vector<16x84xf32>, vector<84x320xf32>, vector<16x320xf32> -> vector<16x320xf32>
    %3 = vector.extract_strided_slice %2 {offsets = [0, 0], sizes = [16, 256], strides = [1, 1]} : vector<16x320xf32> to vector<16x256xf32>
    %c0_3 = arith.constant 0 : index
    %c0_4 = arith.constant 0 : index
    %4 = vector.load %arg3[%c0_3, %c0_4] : memref<1x256xf32, #tpu.memory_space<vmem>>, vector<1x256xf32>
    %5 = vector.broadcast %4 : vector<1x256xf32> to vector<16x256xf32>
    %6 = arith.addf %3, %5 : vector<16x256xf32>
    %cst_5 = arith.constant 0.000000e+00 : f32
    %7 = vector.broadcast %cst_5 : f32 to vector<16x256xf32>
    %8 = arith.maximumf %6, %7 : vector<16x256xf32>
    %9 = vector.extract_strided_slice %2 {offsets = [0, 256], sizes = [16, 64], strides = [1, 1]} : vector<16x320xf32> to vector<16x64xf32>
    %c0_6 = arith.constant 0 : index
    %c0_7 = arith.constant 0 : index
    %10 = vector.load %arg4[%c0_6, %c0_7] : memref<256x160xf32, #tpu.memory_space<vmem>>, vector<256x160xf32>
    %cst_8 = arith.constant dense<0.000000e+00> : vector<16x160xf32>
    %11 = tpu.matmul %8, %10, %cst_8 {dimension_numbers = #tpu.dot_dimension_numbers<[1], [0], [0], [1], [0, 0, 1, 1], [], []>} : vector<16x256xf32>, vector<256x160xf32>, vector<16x160xf32> -> vector<16x160xf32>
    %c0_9 = arith.constant 0 : index
    %c0_10 = arith.constant 0 : index
    %12 = vector.load %arg5[%c0_9, %c0_10] : memref<1x160xf32, #tpu.memory_space<vmem>>, vector<1x160xf32>
    %13 = vector.broadcast %12 : vector<1x160xf32> to vector<16x160xf32>
    %14 = arith.addf %11, %13 : vector<16x160xf32>
    %cst_11 = arith.constant 0.000000e+00 : f32
    %15 = vector.broadcast %cst_11 : f32 to vector<16x160xf32>
    %16 = arith.maximumf %14, %15 : vector<16x160xf32>
    %c0_12 = arith.constant 0 : index
    %c0_13 = arith.constant 0 : index
    %17 = vector.load %arg6[%c0_12, %c0_13] : memref<160x64xf32, #tpu.memory_space<vmem>>, vector<160x64xf32>
    %cst_14 = arith.constant dense<0.000000e+00> : vector<16x64xf32>
    %18 = tpu.matmul %16, %17, %cst_14 {dimension_numbers = #tpu.dot_dimension_numbers<[1], [0], [0], [1], [0, 0, 1, 1], [], []>} : vector<16x160xf32>, vector<160x64xf32>, vector<16x64xf32> -> vector<16x64xf32>
    %19 = arith.addf %9, %18 : vector<16x64xf32>
    %c0_15 = arith.constant 0 : index
    %c0_16 = arith.constant 0 : index
    %20 = vector.load %arg7[%c0_15, %c0_16] : memref<1x64xf32, #tpu.memory_space<vmem>>, vector<1x64xf32>
    %21 = vector.broadcast %20 : vector<1x64xf32> to vector<16x64xf32>
    %22 = arith.addf %19, %21 : vector<16x64xf32>
    %cst_17 = arith.constant 0.000000e+00 : f32
    %23 = vector.broadcast %cst_17 : f32 to vector<16x64xf32>
    %24 = arith.maximumf %22, %23 : vector<16x64xf32>
    %c0_18 = arith.constant 0 : index
    %c0_19 = arith.constant 0 : index
    %25 = vector.load %arg8[%c0_18, %c0_19] : memref<64x64xf32, #tpu.memory_space<vmem>>, vector<64x64xf32>
    %cst_20 = arith.constant dense<0.000000e+00> : vector<16x64xf32>
    %26 = tpu.matmul %24, %25, %cst_20 {dimension_numbers = #tpu.dot_dimension_numbers<[1], [0], [0], [1], [0, 0, 1, 1], [], []>} : vector<16x64xf32>, vector<64x64xf32>, vector<16x64xf32> -> vector<16x64xf32>
    %c0_21 = arith.constant 0 : index
    %c0_22 = arith.constant 0 : index
    %27 = vector.load %arg9[%c0_21, %c0_22] : memref<1x64xf32, #tpu.memory_space<vmem>>, vector<1x64xf32>
    %28 = vector.broadcast %27 : vector<1x64xf32> to vector<16x64xf32>
    %29 = arith.addf %26, %28 : vector<16x64xf32>
    %cst_23 = arith.constant 0.000000e+00 : f32
    %30 = vector.broadcast %cst_23 : f32 to vector<16x64xf32>
    %31 = arith.maximumf %29, %30 : vector<16x64xf32>
    %c0_24 = arith.constant 0 : index
    %c0_25 = arith.constant 0 : index
    %32 = vector.load %arg10[%c0_24, %c0_25] : memref<64x64xf32, #tpu.memory_space<vmem>>, vector<64x64xf32>
    %cst_26 = arith.constant dense<0.000000e+00> : vector<16x64xf32>
    %33 = tpu.matmul %31, %32, %cst_26 {dimension_numbers = #tpu.dot_dimension_numbers<[1], [0], [0], [1], [0, 0, 1, 1], [], []>} : vector<16x64xf32>, vector<64x64xf32>, vector<16x64xf32> -> vector<16x64xf32>
    %c0_27 = arith.constant 0 : index
    %c0_28 = arith.constant 0 : index
    %34 = vector.load %arg11[%c0_27, %c0_28] : memref<1x64xf32, #tpu.memory_space<vmem>>, vector<1x64xf32>
    %35 = vector.broadcast %34 : vector<1x64xf32> to vector<16x64xf32>
    %36 = arith.addf %33, %35 : vector<16x64xf32>
    %cst_29 = arith.constant 0.000000e+00 : f32
    %37 = vector.broadcast %cst_29 : f32 to vector<16x64xf32>
    %38 = arith.maximumf %36, %37 : vector<16x64xf32>
    %c0_30 = arith.constant 0 : index
    %c0_31 = arith.constant 0 : index
    %39 = vector.load %arg12[%c0_30, %c0_31] : memref<64x128xf32, #tpu.memory_space<vmem>>, vector<64x128xf32>
    %cst_32 = arith.constant dense<0.000000e+00> : vector<16x128xf32>
    %40 = tpu.matmul %38, %39, %cst_32 {dimension_numbers = #tpu.dot_dimension_numbers<[1], [0], [0], [1], [0, 0, 1, 1], [], []>} : vector<16x64xf32>, vector<64x128xf32>, vector<16x128xf32> -> vector<16x128xf32>
    %c0_33 = arith.constant 0 : index
    %c0_34 = arith.constant 0 : index
    %41 = vector.load %arg13[%c0_33, %c0_34] : memref<1x128xf32, #tpu.memory_space<vmem>>, vector<1x128xf32>
    %42 = vector.broadcast %41 : vector<1x128xf32> to vector<16x128xf32>
    %43 = arith.addf %40, %42 : vector<16x128xf32>
    %c0_35 = arith.constant 0 : index
    %c0_36 = arith.constant 0 : index
    %44 = vector.load %arg14[%c0_35, %c0_36] : memref<16x128xf32, #tpu.memory_space<vmem>>, vector<16x128xf32>
    tpu.vector_store %arg14[%c0_35, %c0_36], %43 {strides = array<i32>} : memref<16x128xf32, #tpu.memory_space<vmem>>, vector<16x128xf32>,
    return
  }
  func.func @transform_0(%arg0: i32) -> (i32, i32) {
    %c0_i32 = arith.constant 0 : i32
    %c0_i32_0 = arith.constant 0 : i32
    return %arg0, %c0_i32 : i32, i32
  }
  func.func @transform_1(%arg0: i32) -> (i32, i32) {
    %c0_i32 = arith.constant 0 : i32
    %c0_i32_0 = arith.constant 0 : i32
    %c0_i32_1 = arith.constant 0 : i32
    return %c0_i32, %c0_i32_0 : i32, i32
  }
  func.func @transform_2(%arg0: i32) -> (i32, i32) {
    %c0_i32 = arith.constant 0 : i32
    %c0_i32_0 = arith.constant 0 : i32
    %c0_i32_1 = arith.constant 0 : i32
    return %c0_i32, %c0_i32_0 : i32, i32
  }
  func.func @transform_3(%arg0: i32) -> (i32, i32) {
    %c0_i32 = arith.constant 0 : i32
    %c0_i32_0 = arith.constant 0 : i32
    %c0_i32_1 = arith.constant 0 : i32
    return %c0_i32, %c0_i32_0 : i32, i32
  }
  func.func @transform_4(%arg0: i32) -> (i32, i32) {
    %c0_i32 = arith.constant 0 : i32
    %c0_i32_0 = arith.constant 0 : i32
    %c0_i32_1 = arith.constant 0 : i32
    return %c0_i32, %c0_i32_0 : i32, i32
  }
  func.func @transform_5(%arg0: i32) -> (i32, i32) {
    %c0_i32 = arith.constant 0 : i32
    %c0_i32_0 = arith.constant 0 : i32
    %c0_i32_1 = arith.constant 0 : i32
    return %c0_i32, %c0_i32_0 : i32, i32
  }
  func.func @transform_6(%arg0: i32) -> (i32, i32) {
    %c0_i32 = arith.constant 0 : i32
    %c0_i32_0 = arith.constant 0 : i32
    %c0_i32_1 = arith.constant 0 : i32
    return %c0_i32, %c0_i32_0 : i32, i32
  }
  func.func @transform_7(%arg0: i32) -> (i32, i32) {
    %c0_i32 = arith.constant 0 : i32
    %c0_i32_0 = arith.constant 0 : i32
    %c0_i32_1 = arith.constant 0 : i32
    return %c0_i32, %c0_i32_0 : i32, i32
  }
  func.func @transform_8(%arg0: i32) -> (i32, i32) {
    %c0_i32 = arith.constant 0 : i32
    %c0_i32_0 = arith.constant 0 : i32
    %c0_i32_1 = arith.constant 0 : i32
    return %c0_i32, %c0_i32_0 : i32, i32
  }
  func.func @transform_9(%arg0: i32) -> (i32, i32) {
    %c0_i32 = arith.constant 0 : i32
    %c0_i32_0 = arith.constant 0 : i32
    %c0_i32_1 = arith.constant 0 : i32
    return %c0_i32, %c0_i32_0 : i32, i32
  }
  func.func @transform_10(%arg0: i32) -> (i32, i32) {
    %c0_i32 = arith.constant 0 : i32
    %c0_i32_0 = arith.constant 0 : i32
    %c0_i32_1 = arith.constant 0 : i32
    return %c0_i32, %c0_i32_0 : i32, i32
  }
  func.func @transform_11(%arg0: i32) -> (i32, i32) {
    %c0_i32 = arith.constant 0 : i32
    %c0_i32_0 = arith.constant 0 : i32
    %c0_i32_1 = arith.constant 0 : i32
    return %c0_i32, %c0_i32_0 : i32, i32
  }
  func.func @transform_12(%arg0: i32) -> (i32, i32) {
    %c0_i32 = arith.constant 0 : i32
    %c0_i32_0 = arith.constant 0 : i32
    %c0_i32_1 = arith.constant 0 : i32
    return %c0_i32, %c0_i32_0 : i32, i32
  }
  func.func @transform_13(%arg0: i32) -> (i32, i32) {
    %c0_i32 = arith.constant 0 : i32
    %c0_i32_0 = arith.constant 0 : i32
    return %arg0, %c0_i32 : i32, i32
  }
}

</mosaic_0001>

<llo_original>
// kernel: tpu_custom_call.1
$region0: #{tpu_custom_call.1}
  #allocation0 [shape = 'u32[]', space=smem, size = 0x4, offset = 0x4, fixed_abs, tag = 'smem constant byte address 0x4 - core index']
  #allocation1 [shape = 'u32[144,128]{1,0:T(1,128)}', space=vmem, size = 0x12000, scoped, tag = 'internal scratch']
  %s0 = inlined_call_operand.hbm [shape: f32[8,128], index: 0, kind: input, shape index: {}]
  %s1 = inlined_call_operand.hbm [shape: f32[16,128], index: 1, kind: output, shape index: {}]
  %s2 = sld [smem:[#allocation0]]
  $region41: #{tpu_custom_call.1} parent=0
    _
  %s4 = ssub.s32 1, %s2
  %s5 = scalar_select 0, %s4, %s2
  $region1: #{tpu_custom_call.1} parent=0
    #allocation2 [shape = 'u8[4096]{0}', space=vmem, size = 0x1000, scoped, tag = 'input window, operand 0, single buffered']
    #allocation3 [shape = 's32[2]{0}', space=sflag, size = 0x8, scoped, tag = 'scoped memory for tpu_custom_call.1']
    #allocation4 [shape = 's32[2]{0}', space=sflag, size = 0x8, scoped, tag = 'scoped memory for tpu_custom_call.1']
    #allocation5 [shape = 'u8[8192]{0}', space=vmem, size = 0x2000, scoped, tag = 'output window, operand 0']
    %6 = vsyncpa [#allocation3], 0
    %7 = vsyncpa [#allocation4], 0
    %s8 = scalar_lea.sflag [#allocation4], 1
    %9 = vsyncpa %s8, 0
    loop: start=0, step=1, limit=4
    $region2: #{tpu_custom_call.1} parent=1 // loop_pre_header
      _
    $region3: #{tpu_custom_call.1} parent=1 // loop_header
      %s11 = sphi 0, %s15
      %p12 = scmp.ge.s32.totalorder %s11, 4
      %s19 = sphi 0, %s19
      %s21 = sphi 0, %s19
      %s22 = sphi 0, %s21
      %s36 = sphi 0, %s22
      %s42 = sphi 0, %s44
      %s45 = sphi 0, %s42
      %s46 = sphi 0, %s45
      %s62 = sphi 0, %s46
    $region4: #{tpu_custom_call.1} parent=1 // loop_header_branch
      %14 = sbr.rel (%p12) target = $region8
    $region5: #{tpu_custom_call.1} parent=1 // loop_body
      %s16 = ssub.s32 %s11, 1
      %s17 = ssub.s32 %s11, 2
      %s18 = sadd.s32 %s11, 1
      %s20 = sadd.s32 %s19, 1
      %p23 = scmp.eq.s32.totalorder %s11, 1
      %p24 = scmp.ne.s32.totalorder %s19, %s21
      %p25 = scmp.eq.s32.totalorder %s11, 0
      %p26 = por %p24, %p25
      %p27 = scmp.ne.s32.totalorder %s19, %s21
      %p28 = scmp.eq.s32.totalorder %s16, 1
      %p29 = por %p27, %p28
      %p30 = scmp.ne.s32.totalorder %s21, %s22
      %p31 = scmp.eq.s32.totalorder %s16, 0
      %p32 = por %p30, %p31
      %p33 = scmp.ne.s32.totalorder %s21, %s22
      %p34 = scmp.eq.s32.totalorder %s17, 1
      %p35 = por %p33, %p34
      %p37 = scmp.ne.s32.totalorder %s22, %s36
      %p38 = scmp.eq.s32.totalorder %s17, 0
      %p39 = por %p37, %p38
      %s40 = ssub.s32 %s11, %s18
      %p41 = scmp.eq.s32.totalorder %s40, 0
      %s43 = sadd.s32 %s42, 1
      %s44 = scalar_select %p41, %s42, %s43
      %p47 = pneg %p41
      %p48 = scmp.eq.s32.totalorder %s11, 1
      %p49 = por %p47, %p48
      %p50 = scmp.ne.s32.totalorder %s42, %s45
      %p51 = scmp.eq.s32.totalorder %s11, 0
      %p52 = por %p50, %p51
      %p53 = scmp.ne.s32.totalorder %s42, %s45
      %p54 = scmp.eq.s32.totalorder %s16, 1
      %p55 = por %p53, %p54
      %p56 = scmp.ne.s32.totalorder %s45, %s46
      %p57 = scmp.eq.s32.totalorder %s16, 0
      %p58 = por %p56, %p57
      %p59 = scmp.ne.s32.totalorder %s45, %s46
      %p60 = scmp.eq.s32.totalorder %s17, 1
      %p61 = por %p59, %p60
      %p63 = scmp.ne.s32.totalorder %s46, %s62
      %p64 = scmp.eq.s32.totalorder %s17, 0
      %p65 = por %p63, %p64
      %p66 = scmp.le.s32.totalorder 1, %s11
      %p67 = scmp.lt.s32.totalorder %s11, 3
      %p68 = pnand %p66, %p67
      %p69 = pneg %p68
      // Predicated region
      $region9: #{tpu_custom_call.1} parent=5 // pred_check
        _
      $region10: #{tpu_custom_call.1} parent=5 // pred_check_branch
        %71 = sbr.rel (%p68) target = $region12
      $region11: #{tpu_custom_call.1} parent=5 // pred_region
        %s72 = ssub.s32 %s11, 1
        // Predicated region
        $region13: #{tpu_custom_call.1} parent=11 // pred_check
          %p73 = pneg %p32
        $region14: #{tpu_custom_call.1} parent=11 // pred_check_branch
          %75 = sbr.rel (%p73) target = $region16
        $region15: #{tpu_custom_call.1} parent=11 // pred_region
          %s77 = ssub.s32 128, 128
          %78 = vsyncadd [#allocation3], %s77
          %s80 = sshll.u32 [#allocation2], 4
          %s81 = int_to_ptr.vmem [resolvable:$true] %s80
          %83 = dma.hbm_to_vmem [thread:$0]  %s0, 128, %s81, [#allocation3]
        $region16: #{tpu_custom_call.1} parent=11 // pred_fallthru
          _
      $region12: #{tpu_custom_call.1} parent=5 // pred_fallthru
        _
      %p84 = scmp.lt.s32.totalorder %s11, 2
      // Predicated region
      $region17: #{tpu_custom_call.1} parent=5 // pred_check
        %p85 = pneg %p84
      $region18: #{tpu_custom_call.1} parent=5 // pred_check_branch
        %87 = sbr.rel (%p85) target = $region20
      $region19: #{tpu_custom_call.1} parent=5 // pred_region
        _
      $region20: #{tpu_custom_call.1} parent=5 // pred_fallthru
        _
      %p88 = scmp.le.s32.totalorder 1, %s11
      %p89 = scmp.lt.s32.totalorder %s11, 3
      %p90 = pnand %p88, %p89
      %p91 = pneg %p90
      // Predicated region
      $region21: #{tpu_custom_call.1} parent=5 // pred_check
        _
      $region22: #{tpu_custom_call.1} parent=5 // pred_check_branch
        %93 = sbr.rel (%p90) target = $region24
      $region23: #{tpu_custom_call.1} parent=5 // pred_region
        %s94 = ssub.s32 %s11, 1
        // Predicated region
        $region25: #{tpu_custom_call.1} parent=23 // pred_check
          %p95 = pneg %p32
        $region26: #{tpu_custom_call.1} parent=23 // pred_check_branch
          %97 = sbr.rel (%p95) target = $region28
        $region27: #{tpu_custom_call.1} parent=23 // pred_region
          %98 = dma.done [#allocation3], 128
        $region28: #{tpu_custom_call.1} parent=23 // pred_fallthru
          _
        %p99 = pneg %p32
        %p100 = pneg %p29
        %p101 = pneg %p58
        %p102 = pneg %p55
        %s103 = sand.u32 %s45, 1
        %s104 = scalar_lea.sflag [#allocation4], %s103
        %s105 = sand.u32 %s45, 1
        %s106 = smul.addr %s105, 8
        %s107 = scalar_lea.vmem [#allocation5], %s106
        %v108 = vld [vmem:[#allocation2] sm:$0xff]
        %109 = vst [vmem:[%s107] sm:$0xff] %v108
        %s110 = sand.u32 %s45, 1
        %s111 = scalar_lea.sflag [#allocation4], %s110
        %s112 = sand.u32 %s45, 1
        %s113 = smul.addr %s112, 8
        %s114 = scalar_lea.vmem [#allocation5], %s113
        // Predicated region
        $region29: #{tpu_custom_call.1} parent=23 // pred_check
          %p115 = pneg %p55
        $region30: #{tpu_custom_call.1} parent=23 // pred_check_branch
          %117 = sbr.rel (%p115) target = $region32
        $region31: #{tpu_custom_call.1} parent=23 // pred_region
          %s119 = ssub.s32 128, 128
          %120 = vsyncadd %s111, %s119
          %s121 = smul.addr %s16, 128
          %s122 = scalar_lea.hbm %s1, %s121
          %s124 = sshll.u32 %s114, 4
          %s125 = int_to_ptr.vmem [resolvable:$true] %s124
          %127 = dma.vmem_to_hbm [thread:$0]  %s125, 128, %s122, %s111
        $region32: #{tpu_custom_call.1} parent=23 // pred_fallthru
          _
      $region24: #{tpu_custom_call.1} parent=5 // pred_fallthru
        _
      %p128 = scmp.le.s32.totalorder 2, %s11
      // Predicated region
      $region33: #{tpu_custom_call.1} parent=5 // pred_check
        %p129 = pneg %p128
      $region34: #{tpu_custom_call.1} parent=5 // pred_check_branch
        %131 = sbr.rel (%p129) target = $region36
      $region35: #{tpu_custom_call.1} parent=5 // pred_region
        %s132 = ssub.s32 %s11, 2
        // Predicated region
        $region37: #{tpu_custom_call.1} parent=35 // pred_check
          %p133 = pneg %p61
        $region38: #{tpu_custom_call.1} parent=35 // pred_check_branch
          %135 = sbr.rel (%p133) target = $region40
        $region39: #{tpu_custom_call.1} parent=35 // pred_region
          %s136 = sand.u32 %s46, 1
          %s137 = scalar_lea.sflag [#allocation4], %s136
          %s138 = sand.u32 %s46, 1
          %s139 = smul.addr %s138, 8
          %s140 = scalar_lea.vmem [#allocation5], %s139
          %141 = dma.done %s137, 128
        $region40: #{tpu_custom_call.1} parent=35 // pred_fallthru
          _
      $region36: #{tpu_custom_call.1} parent=5 // pred_fallthru
        _
    $region6: #{tpu_custom_call.1} parent=1 // loop_footer
      %s15 = sadd.s32 1, %s11
    $region7: #{tpu_custom_call.1} parent=1 // loop_footer_branch
      %10 = sbr.rel target = $region3
    $region8: #{tpu_custom_call.1} parent=1 // loop_exit
      _
    %142 = vsyncpa [#allocation3], 1
    %s143 = scalar_lea.sflag [#allocation3], 1
    %144 = vsyncpa %s143, 1
    %145 = vsyncpa [#allocation4], 1
    %s146 = scalar_lea.sflag [#allocation4], 1
    %147 = vsyncpa %s146, 1

// kernel: _forward_jit.1
$region0: #{_forward_jit.1}
  #allocation0 [shape = 'u32[]', space=smem, size = 0x4, offset = 0x4, fixed_abs, tag = 'smem constant byte address 0x4 - core index']
  #allocation1 [shape = 'u32[144,128]{1,0:T(1,128)}', space=vmem, size = 0x12000, scoped, tag = 'internal scratch']
  %s0 = inlined_call_operand.vmem [shape: f32[16,84], index: 0, kind: input, shape index: {}]
  %s1 = inlined_call_operand.vmem [shape: f32[84,320], index: 1, kind: input, shape index: {}]
  %s2 = inlined_call_operand.vmem [shape: f32[1,256], index: 2, kind: input, shape index: {}]
  %s3 = inlined_call_operand.vmem [shape: f32[256,160], index: 3, kind: input, shape index: {}]
  %s4 = inlined_call_operand.vmem [shape: f32[1,160], index: 4, kind: input, shape index: {}]
  %s5 = inlined_call_operand.vmem [shape: f32[160,64], index: 5, kind: input, shape index: {}]
  %s6 = inlined_call_operand.vmem [shape: f32[1,64], index: 6, kind: input, shape index: {}]
  %s7 = inlined_call_operand.vmem [shape: f32[64,64], index: 7, kind: input, shape index: {}]
  %s8 = inlined_call_operand.vmem [shape: f32[1,64], index: 8, kind: input, shape index: {}]
  %s9 = inlined_call_operand.vmem [shape: f32[64,64], index: 9, kind: input, shape index: {}]
  %s10 = inlined_call_operand.vmem [shape: f32[1,64], index: 10, kind: input, shape index: {}]
  %s11 = inlined_call_operand.vmem [shape: f32[64,128], index: 11, kind: input, shape index: {}]
  %s12 = inlined_call_operand.vmem [shape: f32[1,128], index: 12, kind: input, shape index: {}]
  %s13 = inlined_call_operand.vmem [shape: f32[16,128], index: 13, kind: output, shape index: {}]
  %s14 = sld [smem:[#allocation0]]
  $region62: #{_forward_jit.1} parent=0
    _
  %s16 = ssub.s32 1, %s14
  %s17 = scalar_select 0, %s16, %s14
  // Predicated region
  $region2: #{_forward_jit.1} parent=0 // pred_check
    _
  $region3: #{_forward_jit.1} parent=0 // pred_check_branch
    %19 = sbr.rel (0) target = $region5
  $region4: #{_forward_jit.1} parent=0 // pred_region
    _
  $region5: #{_forward_jit.1} parent=0 // pred_fallthru
    _
  // Predicated region
  $region6: #{_forward_jit.1} parent=0 // pred_check
    _
  $region7: #{_forward_jit.1} parent=0 // pred_check_branch
    %21 = sbr.rel (0) target = $region9
  $region8: #{_forward_jit.1} parent=0 // pred_region
    _
  $region9: #{_forward_jit.1} parent=0 // pred_fallthru
    _
  // Predicated region
  $region10: #{_forward_jit.1} parent=0 // pred_check
    _
  $region11: #{_forward_jit.1} parent=0 // pred_check_branch
    %23 = sbr.rel (0) target = $region13
  $region12: #{_forward_jit.1} parent=0 // pred_region
    _
  $region13: #{_forward_jit.1} parent=0 // pred_fallthru
    _
  // Predicated region
  $region14: #{_forward_jit.1} parent=0 // pred_check
    _
  $region15: #{_forward_jit.1} parent=0 // pred_check_branch
    %25 = sbr.rel (0) target = $region17
  $region16: #{_forward_jit.1} parent=0 // pred_region
    _
  $region17: #{_forward_jit.1} parent=0 // pred_fallthru
    _
  // Predicated region
  $region18: #{_forward_jit.1} parent=0 // pred_check
    _
  $region19: #{_forward_jit.1} parent=0 // pred_check_branch
    %27 = sbr.rel (0) target = $region21
  $region20: #{_forward_jit.1} parent=0 // pred_region
    _
  $region21: #{_forward_jit.1} parent=0 // pred_fallthru
    _
  // Predicated region
  $region22: #{_forward_jit.1} parent=0 // pred_check
    _
  $region23: #{_forward_jit.1} parent=0 // pred_check_branch
    %29 = sbr.rel (0) target = $region25
  $region24: #{_forward_jit.1} parent=0 // pred_region
    _
  $region25: #{_forward_jit.1} parent=0 // pred_fallthru
    _
  // Predicated region
  $region26: #{_forward_jit.1} parent=0 // pred_check
    _
  $region27: #{_forward_jit.1} parent=0 // pred_check_branch
    %31 = sbr.rel (0) target = $region29
  $region28: #{_forward_jit.1} parent=0 // pred_region
    _
  $region29: #{_forward_jit.1} parent=0 // pred_fallthru
    _
  // Predicated region
  $region30: #{_forward_jit.1} parent=0 // pred_check
    _
  $region31: #{_forward_jit.1} parent=0 // pred_check_branch
    %33 = sbr.rel (0) target = $region33
  $region32: #{_forward_jit.1} parent=0 // pred_region
    _
  $region33: #{_forward_jit.1} parent=0 // pred_fallthru
    _
  // Predicated region
  $region34: #{_forward_jit.1} parent=0 // pred_check
    _
  $region35: #{_forward_jit.1} parent=0 // pred_check_branch
    %35 = sbr.rel (0) target = $region37
  $region36: #{_forward_jit.1} parent=0 // pred_region
    _
  $region37: #{_forward_jit.1} parent=0 // pred_fallthru
    _
  // Predicated region
  $region38: #{_forward_jit.1} parent=0 // pred_check
    _
  $region39: #{_forward_jit.1} parent=0 // pred_check_branch
    %37 = sbr.rel (0) target = $region41
  $region40: #{_forward_jit.1} parent=0 // pred_region
    _
  $region41: #{_forward_jit.1} parent=0 // pred_fallthru
    _
  // Predicated region
  $region42: #{_forward_jit.1} parent=0 // pred_check
    _
  $region43: #{_forward_jit.1} parent=0 // pred_check_branch
    %39 = sbr.rel (0) target = $region45
  $region44: #{_forward_jit.1} parent=0 // pred_region
    _
  $region45: #{_forward_jit.1} parent=0 // pred_fallthru
    _
  // Predicated region
  $region46: #{_forward_jit.1} parent=0 // pred_check
    _
  $region47: #{_forward_jit.1} parent=0 // pred_check_branch
    %41 = sbr.rel (0) target = $region49
  $region48: #{_forward_jit.1} parent=0 // pred_region
    _
  $region49: #{_forward_jit.1} parent=0 // pred_fallthru
    _
  // Predicated region
  $region50: #{_forward_jit.1} parent=0 // pred_check
    _
  $region51: #{_forward_jit.1} parent=0 // pred_check_branch
    %43 = sbr.rel (0) target = $region53
  $region52: #{_forward_jit.1} parent=0 // pred_region
    _
  $region53: #{_forward_jit.1} parent=0 // pred_fallthru
    _
  %v44 = vld [vmem:[%s0] sm:$0xff]
  %v45 = vld [vmem:[%s0 + $0x8] sm:$0xff]
  %v46 = vld [vmem:[%s1] sm:$0xff]
  %v47 = vld [vmem:[%s1 + $0x8] sm:$0xff]
  %v48 = vld [vmem:[%s1 + $0x10] sm:$0xff]
  %v49 = vld [vmem:[%s1 + $0x18] sm:$0xff]
  %v50 = vld [vmem:[%s1 + $0x20] sm:$0xff]
  %v51 = vld [vmem:[%s1 + $0x28] sm:$0xff]
  %v52 = vld [vmem:[%s1 + $0x30] sm:$0xff]
  %v53 = vld [vmem:[%s1 + $0x38] sm:$0xff]
  %v54 = vld [vmem:[%s1 + $0x40] sm:$0xff]
  %v55 = vld [vmem:[%s1 + $0x48] sm:$0xff]
  %v56 = vld [vmem:[%s1 + $0x50] sm:$0xff]
  %v57 = vld [vmem:[%s1 + $0x58] sm:$0xff]
  %v58 = vld [vmem:[%s1 + $0x60] sm:$0xff]
  %v59 = vld [vmem:[%s1 + $0x68] sm:$0xff]
  %v60 = vld [vmem:[%s1 + $0x70] sm:$0xff]
  %v61 = vld [vmem:[%s1 + $0x78] sm:$0xff]
  %v62 = vld [vmem:[%s1 + $0x80] sm:$0xff]
  %v63 = vld [vmem:[%s1 + $0x88] sm:$0xff]
  %v64 = vld [vmem:[%s1 + $0x90] sm:$0xff]
  %v65 = vld [vmem:[%s1 + $0x98] sm:$0xff]
  %v66 = vld [vmem:[%s1 + $0xa0] sm:$0xff]
  %v67 = vld [vmem:[%s1 + $0xa8] sm:$0xff]
  %v68 = vld [vmem:[%s1 + $0xb0] sm:$0xff]
  %v69 = vld [vmem:[%s1 + $0xb8] sm:$0xff]
  %v70 = vld [vmem:[%s1 + $0xc0] sm:$0xff]
  %v71 = vld [vmem:[%s1 + $0xc8] sm:$0xff]
  %v72 = vld [vmem:[%s1 + $0xd0] sm:$0xff]
  %v73 = vld [vmem:[%s1 + $0xd8] sm:$0xff]
  %v74 = vld [vmem:[%s1 + $0xe0] sm:$0xff]
  %v75 = vld [vmem:[%s1 + $0xe8] sm:$0xff]
  %v76 = vld [vmem:[%s1 + $0xf0] sm:$0xf]
  %v77 = vld [vmem:[%s1 + $0xf8] sm:$0xf]
  %v78 = vld [vmem:[%s1 + $0x100] sm:$0xf]
  %vm79 = vcmask 687104
  %v81 = vsel %vm79, %v44, 0
  %v84 = vsel %vm79, %v45, 0
  %vm86 = vcmask 1043456
  %v88 = vsel %vm86, %v76, 0
  %v91 = vsel %vm86, %v77, 0
  %v94 = vsel %vm86, %v78, 0
  %96 = vmatprep.subr.mxu0 %v47
  %97 = vmatpush1.msra.mxu0 %v46
  %98 = vmatprep.subr.mxu0 %v50
  %99 = vmatpush1.msra.mxu0 %v49
  %100 = vmatprep.subr.mxu0 %v53
  %101 = vmatpush1.msra.mxu0 %v52
  %102 = vmatprep.subr.mxu0 %v56
  %103 = vmatpush1.msra.mxu0 %v55
  %104 = vmatprep.subr.mxu0 %v59
  %105 = vmatpush1.msra.mxu0 %v58
  %106 = vmatprep.subr.mxu0 %v62
  %107 = vmatpush1.msra.mxu0 %v61
  %108 = vmatprep.subr.mxu0 %v65
  %109 = vmatpush1.msra.mxu0 %v64
  %110 = vmatprep.subr.mxu0 %v68
  %111 = vmatpush1.msra.mxu0 %v67
  %112 = vmatprep.subr.mxu0 %v71
  %113 = vmatpush1.msra.mxu0 %v70
  %114 = vmatprep.subr.mxu0 %v74
  %115 = vmatpush1.msra.mxu0 %v73
  %116 = vmatprep.subr.mxu0 %v91
  %117 = vmatpush1.msra.mxu0 %v88
  %118 = vmatprep.subr.mxu0 0.0
  %119 = vmatpush1.msra.mxu0 0.0
  %120 = vmatprep.subr.mxu0 0.0
  %121 = vmatpush1.msra.mxu0 0.0
  %122 = vmatprep.subr.mxu0 0.0
  %123 = vmatpush1.msra.mxu0 0.0
  %124 = vmatprep.subr.mxu0 0.0
  %125 = vmatpush1.msra.mxu0 0.0
  %126 = vmatprep.subr.mxu0 0.0
  %127 = vmatpush1.msra.mxu0 0.0
  %128 = vmatprep.subr.mxu0 0.0
  %129 = vmatpush1.msra.mxu0 0.0
  %130 = vmatprep.subr.mxu0 0.0
  %131 = vmatpush1.msra.mxu0 0.0
  %132 = vmatprep.subr.mxu0 0.0
  %133 = vmatpush1.msra.mxu0 0.0
  %134 = vmatprep.subr.mxu0 0.0
  %135 = vmatpush1.msra.mxu0 0.0
  %136 = vmatprep.subr.mxu0 0.0
  %137 = vmatpush1.msra.mxu0 0.0
  %138 = vmatprep.subr.mxu0 0.0
  %139 = vmatpush1.msra.mxu0 0.0
  %140 = vmatprep.subr.mxu0 0.0
  %141 = vmatpush1.msra.mxu0 0.0
  %142 = vmatprep.subr.mxu0 0.0
  %143 = vmatpush1.msra.mxu0 0.0
  %144 = vmatprep.subr.mxu0 0.0
  %145 = vmatpush1.msra.mxu0 0.0
  %146 = vmatprep.subr.mxu0 0.0
  %147 = vmatpush1.msra.mxu0 0.0
  %148 = vmatprep.subr.mxu0 0.0
  %149 = vmatpush1.msra.mxu0 0.0
  %150 = vmatprep.subr.mxu0 0.0
  %151 = vmatpush1.msra.mxu0 0.0
  %152 = vmatprep.subr.mxu0 0.0
  %153 = vmatpush1.msra.mxu0 0.0
  %154 = vmatprep.subr.mxu0 0.0
  %155 = vmatpush1.msra.mxu0 0.0
  %156 = vmatprep.subr.mxu0 0.0
  %157 = vmatpush1.msra.mxu0 0.0
  %158 = vmatprep.subr.mxu0 0.0
  %159 = vmatpush1.msra.mxu0 0.0
  %160 = vmatprep.mubr.f32.mxu0 0.0
  %161 = vmatmul.mubr.f32.gmra.mrb[0].mxu0 %v81
  %v162 = vpop.f32.mrb[0].mxu0
  %v163 = vadd.f32 0.0, %v162
  %v164 = vpop.f32.mrb[0].mxu0
  %v165 = vadd.f32 0.0, %v164
  %166 = vmatprep.mubr.f32.mxu0 0.0
  %167 = vmatmul.mubr.f32.gmra.mrb[0].mxu0 %v84
  %v168 = vpop.f32.mrb[0].mxu0
  %v169 = vadd.f32 0.0, %v168
  %v170 = vpop.f32.mrb[0].mxu0
  %v171 = vadd.f32 0.0, %v170
  %172 = vdwg.mxu0
  %173 = vmatprep.subr.mxu0 0.0
  %174 = vmatpush1.msra.mxu0 %v48
  %175 = vmatprep.subr.mxu0 0.0
  %176 = vmatpush1.msra.mxu0 %v51
  %177 = vmatprep.subr.mxu0 0.0
  %178 = vmatpush1.msra.mxu0 %v54
  %179 = vmatprep.subr.mxu0 0.0
  %180 = vmatpush1.msra.mxu0 %v57
  %181 = vmatprep.subr.mxu0 0.0
  %182 = vmatpush1.msra.mxu0 %v60
  %183 = vmatprep.subr.mxu0 0.0
  %184 = vmatpush1.msra.mxu0 %v63
  %185 = vmatprep.subr.mxu0 0.0
  %186 = vmatpush1.msra.mxu0 %v66
  %187 = vmatprep.subr.mxu0 0.0
  %188 = vmatpush1.msra.mxu0 %v69
  %189 = vmatprep.subr.mxu0 0.0
  %190 = vmatpush1.msra.mxu0 %v72
  %191 = vmatprep.subr.mxu0 0.0
  %192 = vmatpush1.msra.mxu0 %v75
  %193 = vmatprep.subr.mxu0 0.0
  %194 = vmatpush1.msra.mxu0 %v94
  %195 = vmatprep.subr.mxu0 0.0
  %196 = vmatpush1.msra.mxu0 0.0
  %197 = vmatprep.subr.mxu0 0.0
  %198 = vmatpush1.msra.mxu0 0.0
  %199 = vmatprep.subr.mxu0 0.0
  %200 = vmatpush1.msra.mxu0 0.0
  %201 = vmatprep.subr.mxu0 0.0
  %202 = vmatpush1.msra.mxu0 0.0
  %203 = vmatprep.subr.mxu0 0.0
  %204 = vmatpush1.msra.mxu0 0.0
  %205 = vmatprep.subr.mxu0 0.0
  %206 = vmatpush1.msra.mxu0 0.0
  %207 = vmatprep.subr.mxu0 0.0
  %208 = vmatpush1.msra.mxu0 0.0
  %209 = vmatprep.subr.mxu0 0.0
  %210 = vmatpush1.msra.mxu0 0.0
  %211 = vmatprep.subr.mxu0 0.0
  %212 = vmatpush1.msra.mxu0 0.0
  %213 = vmatprep.subr.mxu0 0.0
  %214 = vmatpush1.msra.mxu0 0.0
  %215 = vmatprep.subr.mxu0 0.0
  %216 = vmatpush1.msra.mxu0 0.0
  %217 = vmatprep.subr.mxu0 0.0
  %218 = vmatpush1.msra.mxu0 0.0
  %219 = vmatprep.subr.mxu0 0.0
  %220 = vmatpush1.msra.mxu0 0.0
  %221 = vmatprep.subr.mxu0 0.0
  %222 = vmatpush1.msra.mxu0 0.0
  %223 = vmatprep.subr.mxu0 0.0
  %224 = vmatpush1.msra.mxu0 0.0
  %225 = vmatprep.subr.mxu0 0.0
  %226 = vmatpush1.msra.mxu0 0.0
  %227 = vmatprep.subr.mxu0 0.0
  %228 = vmatpush1.msra.mxu0 0.0
  %229 = vmatprep.subr.mxu0 0.0
  %230 = vmatpush1.msra.mxu0 0.0
  %231 = vmatprep.subr.mxu0 0.0
  %232 = vmatpush1.msra.mxu0 0.0
  %233 = vmatprep.subr.mxu0 0.0
  %234 = vmatpush1.msra.mxu0 0.0
  %235 = vmatprep.subr.mxu0 0.0
  %236 = vmatpush1.msra.mxu0 0.0
  %237 = vmatprep.mubr.f32.mxu0 0.0
  %238 = vmatmul.mubr.f32.gmra.mrb[0].mxu0 %v81
  %v239 = vpop.f32.mrb[0].mxu0
  %v240 = vadd.f32 0.0, %v239
  %v241 = vpop.f32.mrb[0].mxu0
  %242 = vmatprep.mubr.f32.mxu0 0.0
  %243 = vmatmul.mubr.f32.gmra.mrb[0].mxu0 %v84
  %v244 = vpop.f32.mrb[0].mxu0
  %v245 = vadd.f32 0.0, %v244
  %v246 = vpop.f32.mrb[0].mxu0
  %247 = vdwg.mxu0
  %v248 = vld [vmem:[%s2] sm:$0x3]
  %v250 = vlaneseq
  %v251 = vshrl.u32 %v250, 7
  %v252 = vsub.s32 0, %v251
  %v253 = vrot.slane %v248, %v252
  %v254 = vlaneseq
  %v255 = vshrl.u32 %v254, 7
  %v256 = vsub.s32 1, %v255
  %v257 = vrot.slane %v248, %v256
  %v260 = vadd.f32 %v163, %v253
  %v261 = vadd.f32 %v165, %v257
  %v262 = vadd.f32 %v169, %v253
  %v263 = vadd.f32 %v171, %v257
  %v264 = vmax.f32 %v260, 0.0
  %v265 = vmax.f32 %v261, 0.0
  %v266 = vmax.f32 %v262, 0.0
  %v267 = vmax.f32 %v263, 0.0
  %v268 = vld [vmem:[%s3] sm:$0xff]
  %v269 = vld [vmem:[%s3 + $0x8] sm:$0xff]
  %v270 = vld [vmem:[%s3 + $0x10] sm:$0xff]
  %v271 = vld [vmem:[%s3 + $0x18] sm:$0xff]
  %v272 = vld [vmem:[%s3 + $0x20] sm:$0xff]
  %v273 = vld [vmem:[%s3 + $0x28] sm:$0xff]
  %v274 = vld [vmem:[%s3 + $0x30] sm:$0xff]
  %v275 = vld [vmem:[%s3 + $0x38] sm:$0xff]
  %v276 = vld [vmem:[%s3 + $0x40] sm:$0xff]
  %v277 = vld [vmem:[%s3 + $0x48] sm:$0xff]
  %v278 = vld [vmem:[%s3 + $0x50] sm:$0xff]
  %v279 = vld [vmem:[%s3 + $0x58] sm:$0xff]
  %v280 = vld [vmem:[%s3 + $0x60] sm:$0xff]
  %v281 = vld [vmem:[%s3 + $0x68] sm:$0xff]
  %v282 = vld [vmem:[%s3 + $0x70] sm:$0xff]
  %v283 = vld [vmem:[%s3 + $0x78] sm:$0xff]
  %v284 = vld [vmem:[%s3 + $0x80] sm:$0xff]
  %v285 = vld [vmem:[%s3 + $0x88] sm:$0xff]
  %v286 = vld [vmem:[%s3 + $0x90] sm:$0xff]
  %v287 = vld [vmem:[%s3 + $0x98] sm:$0xff]
  %v288 = vld [vmem:[%s3 + $0xa0] sm:$0xff]
  %v289 = vld [vmem:[%s3 + $0xa8] sm:$0xff]
  %v290 = vld [vmem:[%s3 + $0xb0] sm:$0xff]
  %v291 = vld [vmem:[%s3 + $0xb8] sm:$0xff]
  %v292 = vld [vmem:[%s3 + $0xc0] sm:$0xff]
  %v293 = vld [vmem:[%s3 + $0xc8] sm:$0xff]
  %v294 = vld [vmem:[%s3 + $0xd0] sm:$0xff]
  %v295 = vld [vmem:[%s3 + $0xd8] sm:$0xff]
  %v296 = vld [vmem:[%s3 + $0xe0] sm:$0xff]
  %v297 = vld [vmem:[%s3 + $0xe8] sm:$0xff]
  %v298 = vld [vmem:[%s3 + $0xf0] sm:$0xff]
  %v299 = vld [vmem:[%s3 + $0xf8] sm:$0xff]
  %v300 = vld [vmem:[%s3 + $0x100] sm:$0xff]
  %v301 = vld [vmem:[%s3 + $0x108] sm:$0xff]
  %v302 = vld [vmem:[%s3 + $0x110] sm:$0xff]
  %v303 = vld [vmem:[%s3 + $0x118] sm:$0xff]
  %v304 = vld [vmem:[%s3 + $0x120] sm:$0xff]
  %v305 = vld [vmem:[%s3 + $0x128] sm:$0xff]
  %v306 = vld [vmem:[%s3 + $0x130] sm:$0xff]
  %v307 = vld [vmem:[%s3 + $0x138] sm:$0xff]
  %v308 = vld [vmem:[%s3 + $0x140] sm:$0xff]
  %v309 = vld [vmem:[%s3 + $0x148] sm:$0xff]
  %v310 = vld [vmem:[%s3 + $0x150] sm:$0xff]
  %v311 = vld [vmem:[%s3 + $0x158] sm:$0xff]
  %v312 = vld [vmem:[%s3 + $0x160] sm:$0xff]
  %v313 = vld [vmem:[%s3 + $0x168] sm:$0xff]
  %v314 = vld [vmem:[%s3 + $0x170] sm:$0xff]
  %v315 = vld [vmem:[%s3 + $0x178] sm:$0xff]
  %v316 = vld [vmem:[%s3 + $0x180] sm:$0xff]
  %v317 = vld [vmem:[%s3 + $0x188] sm:$0xff]
  %v318 = vld [vmem:[%s3 + $0x190] sm:$0xff]
  %v319 = vld [vmem:[%s3 + $0x198] sm:$0xff]
  %v320 = vld [vmem:[%s3 + $0x1a0] sm:$0xff]
  %v321 = vld [vmem:[%s3 + $0x1a8] sm:$0xff]
  %v322 = vld [vmem:[%s3 + $0x1b0] sm:$0xff]
  %v323 = vld [vmem:[%s3 + $0x1b8] sm:$0xff]
  %v324 = vld [vmem:[%s3 + $0x1c0] sm:$0xff]
  %v325 = vld [vmem:[%s3 + $0x1c8] sm:$0xff]
  %v326 = vld [vmem:[%s3 + $0x1d0] sm:$0xff]
  %v327 = vld [vmem:[%s3 + $0x1d8] sm:$0xff]
  %v328 = vld [vmem:[%s3 + $0x1e0] sm:$0xff]
  %v329 = vld [vmem:[%s3 + $0x1e8] sm:$0xff]
  %v330 = vld [vmem:[%s3 + $0x1f0] sm:$0xff]
  %v331 = vld [vmem:[%s3 + $0x1f8] sm:$0xff]
  %v332 = vld [vmem:[%s4] sm:$0x3]
  %v334 = vlaneseq
  %v335 = vshrl.u32 %v334, 7
  %v336 = vsub.s32 0, %v335
  %v337 = vrot.slane %v332, %v336
  %v338 = vlaneseq
  %v339 = vshrl.u32 %v338, 7
  %v340 = vsub.s32 1, %v339
  %v341 = vrot.slane %v332, %v340
  %344 = vmatprep.subr.mxu0 %v269
  %345 = vmatpush1.msra.mxu0 %v268
  %346 = vmatprep.subr.mxu0 %v271
  %347 = vmatpush1.msra.mxu0 %v270
  %348 = vmatprep.subr.mxu0 %v273
  %349 = vmatpush1.msra.mxu0 %v272
  %350 = vmatprep.subr.mxu0 %v275
  %351 = vmatpush1.msra.mxu0 %v274
  %352 = vmatprep.subr.mxu0 %v277
  %353 = vmatpush1.msra.mxu0 %v276
  %354 = vmatprep.subr.mxu0 %v279
  %355 = vmatpush1.msra.mxu0 %v278
  %356 = vmatprep.subr.mxu0 %v281
  %357 = vmatpush1.msra.mxu0 %v280
  %358 = vmatprep.subr.mxu0 %v283
  %359 = vmatpush1.msra.mxu0 %v282
  %360 = vmatprep.subr.mxu0 %v285
  %361 = vmatpush1.msra.mxu0 %v284
  %362 = vmatprep.subr.mxu0 %v287
  %363 = vmatpush1.msra.mxu0 %v286
  %364 = vmatprep.subr.mxu0 %v289
  %365 = vmatpush1.msra.mxu0 %v288
  %366 = vmatprep.subr.mxu0 %v291
  %367 = vmatpush1.msra.mxu0 %v290
  %368 = vmatprep.subr.mxu0 %v293
  %369 = vmatpush1.msra.mxu0 %v292
  %370 = vmatprep.subr.mxu0 %v295
  %371 = vmatpush1.msra.mxu0 %v294
  %372 = vmatprep.subr.mxu0 %v297
  %373 = vmatpush1.msra.mxu0 %v296
  %374 = vmatprep.subr.mxu0 %v299
  %375 = vmatpush1.msra.mxu0 %v298
  %376 = vmatprep.subr.mxu0 %v301
  %377 = vmatpush1.msra.mxu0 %v300
  %378 = vmatprep.subr.mxu0 %v303
  %379 = vmatpush1.msra.mxu0 %v302
  %380 = vmatprep.subr.mxu0 %v305
  %381 = vmatpush1.msra.mxu0 %v304
  %382 = vmatprep.subr.mxu0 %v307
  %383 = vmatpush1.msra.mxu0 %v306
  %384 = vmatprep.subr.mxu0 %v309
  %385 = vmatpush1.msra.mxu0 %v308
  %386 = vmatprep.subr.mxu0 %v311
  %387 = vmatpush1.msra.mxu0 %v310
  %388 = vmatprep.subr.mxu0 %v313
  %389 = vmatpush1.msra.mxu0 %v312
  %390 = vmatprep.subr.mxu0 %v315
  %391 = vmatpush1.msra.mxu0 %v314
  %392 = vmatprep.subr.mxu0 %v317
  %393 = vmatpush1.msra.mxu0 %v316
  %394 = vmatprep.subr.mxu0 %v319
  %395 = vmatpush1.msra.mxu0 %v318
  %396 = vmatprep.subr.mxu0 %v321
  %397 = vmatpush1.msra.mxu0 %v320
  %398 = vmatprep.subr.mxu0 %v323
  %399 = vmatpush1.msra.mxu0 %v322
  %400 = vmatprep.subr.mxu0 %v325
  %401 = vmatpush1.msra.mxu0 %v324
  %402 = vmatprep.subr.mxu0 %v327
  %403 = vmatpush1.msra.mxu0 %v326
  %404 = vmatprep.subr.mxu0 %v329
  %405 = vmatpush1.msra.mxu0 %v328
  %406 = vmatprep.subr.mxu0 %v331
  %407 = vmatpush1.msra.mxu0 %v330
  %408 = vmatprep.mubr.f32.mxu0 %v265
  %409 = vmatmul.mubr.f32.gmra.mrb[0].mxu0 %v264
  %v410 = vpop.f32.mrb[0].mxu0
  %v411 = vadd.f32 %v337, %v410
  %v412 = vpop.f32.mrb[0].mxu0
  %v413 = vadd.f32 %v341, %v412
  %414 = vmatprep.mubr.f32.mxu0 %v267
  %415 = vmatmul.mubr.f32.gmra.mrb[0].mxu0 %v266
  %v416 = vpop.f32.mrb[0].mxu0
  %v417 = vadd.f32 %v337, %v416
  %v418 = vpop.f32.mrb[0].mxu0
  %v419 = vadd.f32 %v341, %v418
  %420 = vdwg.mxu0
  %v421 = vmax.f32 %v411, 0.0
  %v422 = vmax.f32 %v413, 0.0
  %v423 = vmax.f32 %v417, 0.0
  %v424 = vmax.f32 %v419, 0.0
  %v425 = vld [vmem:[%s5] sm:$0xff]
  %v426 = vld [vmem:[%s5 + $0x8] sm:$0xff]
  %v427 = vld [vmem:[%s5 + $0x10] sm:$0xff]
  %v428 = vld [vmem:[%s5 + $0x18] sm:$0xff]
  %v429 = vld [vmem:[%s5 + $0x20] sm:$0xff]
  %v430 = vld [vmem:[%s5 + $0x28] sm:$0xff]
  %v431 = vld [vmem:[%s5 + $0x30] sm:$0xff]
  %v432 = vld [vmem:[%s5 + $0x38] sm:$0xff]
  %v433 = vld [vmem:[%s5 + $0x40] sm:$0xff]
  %v434 = vld [vmem:[%s5 + $0x48] sm:$0xff]
  %v435 = vld [vmem:[%s5 + $0x50] sm:$0xff]
  %v436 = vld [vmem:[%s5 + $0x58] sm:$0xff]
  %v437 = vld [vmem:[%s5 + $0x60] sm:$0xff]
  %v438 = vld [vmem:[%s5 + $0x68] sm:$0xff]
  %v439 = vld [vmem:[%s5 + $0x70] sm:$0xff]
  %v440 = vld [vmem:[%s5 + $0x78] sm:$0xff]
  %v441 = vld [vmem:[%s5 + $0x80] sm:$0xff]
  %v442 = vld [vmem:[%s5 + $0x88] sm:$0xff]
  %v443 = vld [vmem:[%s5 + $0x90] sm:$0xff]
  %v444 = vld [vmem:[%s5 + $0x98] sm:$0xff]
  %vm445 = vcmask 261120
  %v447 = vsel %vm445, %v422, 0
  %v450 = vsel %vm445, %v424, 0
  %452 = vmatprep.subr.mxu0 0.0
  %453 = vmatpush1.msra.mxu0 %v425
  %454 = vmatprep.subr.mxu0 0.0
  %455 = vmatpush1.msra.mxu0 %v426
  %456 = vmatprep.subr.mxu0 0.0
  %457 = vmatpush1.msra.mxu0 %v427
  %458 = vmatprep.subr.mxu0 0.0
  %459 = vmatpush1.msra.mxu0 %v428
  %460 = vmatprep.subr.mxu0 0.0
  %461 = vmatpush1.msra.mxu0 %v429
  %462 = vmatprep.subr.mxu0 0.0
  %463 = vmatpush1.msra.mxu0 %v430
  %464 = vmatprep.subr.mxu0 0.0
  %465 = vmatpush1.msra.mxu0 %v431
  %466 = vmatprep.subr.mxu0 0.0
  %467 = vmatpush1.msra.mxu0 %v432
  %468 = vmatprep.subr.mxu0 0.0
  %469 = vmatpush1.msra.mxu0 %v433
  %470 = vmatprep.subr.mxu0 0.0
  %471 = vmatpush1.msra.mxu0 %v434
  %472 = vmatprep.subr.mxu0 0.0
  %473 = vmatpush1.msra.mxu0 %v435
  %474 = vmatprep.subr.mxu0 0.0
  %475 = vmatpush1.msra.mxu0 %v436
  %476 = vmatprep.subr.mxu0 0.0
  %477 = vmatpush1.msra.mxu0 %v437
  %478 = vmatprep.subr.mxu0 0.0
  %479 = vmatpush1.msra.mxu0 %v438
  %480 = vmatprep.subr.mxu0 0.0
  %481 = vmatpush1.msra.mxu0 %v439
  %482 = vmatprep.subr.mxu0 0.0
  %483 = vmatpush1.msra.mxu0 %v440
  %484 = vmatprep.subr.mxu0 0.0
  %485 = vmatpush1.msra.mxu0 %v441
  %486 = vmatprep.subr.mxu0 0.0
  %487 = vmatpush1.msra.mxu0 %v442
  %488 = vmatprep.subr.mxu0 0.0
  %489 = vmatpush1.msra.mxu0 %v443
  %490 = vmatprep.subr.mxu0 0.0
  %491 = vmatpush1.msra.mxu0 %v444
  %492 = vmatprep.subr.mxu0 0.0
  %493 = vmatpush1.msra.mxu0 0.0
  %494 = vmatprep.subr.mxu0 0.0
  %495 = vmatpush1.msra.mxu0 0.0
  %496 = vmatprep.subr.mxu0 0.0
  %497 = vmatpush1.msra.mxu0 0.0
  %498 = vmatprep.subr.mxu0 0.0
  %499 = vmatpush1.msra.mxu0 0.0
  %500 = vmatprep.subr.mxu0 0.0
  %501 = vmatpush1.msra.mxu0 0.0
  %502 = vmatprep.subr.mxu0 0.0
  %503 = vmatpush1.msra.mxu0 0.0
  %504 = vmatprep.subr.mxu0 0.0
  %505 = vmatpush1.msra.mxu0 0.0
  %506 = vmatprep.subr.mxu0 0.0
  %507 = vmatpush1.msra.mxu0 0.0
  %508 = vmatprep.subr.mxu0 0.0
  %509 = vmatpush1.msra.mxu0 0.0
  %510 = vmatprep.subr.mxu0 0.0
  %511 = vmatpush1.msra.mxu0 0.0
  %512 = vmatprep.subr.mxu0 0.0
  %513 = vmatpush1.msra.mxu0 0.0
  %514 = vmatprep.subr.mxu0 0.0
  %515 = vmatpush1.msra.mxu0 0.0
  %516 = vmatprep.mubr.f32.mxu0 %v447
  %517 = vmatmul.mubr.f32.gmra.mrb[0].mxu0 %v421
  %v518 = vpop.f32.mrb[0].mxu0
  %v519 = vadd.f32 0.0, %v518
  %v520 = vpop.f32.mrb[0].mxu0
  %521 = vmatprep.mubr.f32.mxu0 %v450
  %522 = vmatmul.mubr.f32.gmra.mrb[0].mxu0 %v423
  %v523 = vpop.f32.mrb[0].mxu0
  %v524 = vadd.f32 0.0, %v523
  %v525 = vpop.f32.mrb[0].mxu0
  %526 = vdwg.mxu0
  %v527 = vadd.f32 %v240, %v519
  %v528 = vadd.f32 %v245, %v524
  %v529 = vld [vmem:[%s6] sm:$0x1]
  %v531 = vlaneseq
  %v532 = vshrl.u32 %v531, 7
  %v533 = vsub.s32 0, %v532
  %v534 = vrot.slane %v529, %v533
  %v536 = vadd.f32 %v527, %v534
  %v537 = vadd.f32 %v528, %v534
  %v538 = vmax.f32 %v536, 0.0
  %v539 = vmax.f32 %v537, 0.0
  %v540 = vld [vmem:[%s7] sm:$0xff]
  %v541 = vld [vmem:[%s7 + $0x8] sm:$0xff]
  %v542 = vld [vmem:[%s7 + $0x10] sm:$0xff]
  %v543 = vld [vmem:[%s7 + $0x18] sm:$0xff]
  %v544 = vld [vmem:[%s7 + $0x20] sm:$0xff]
  %v545 = vld [vmem:[%s7 + $0x28] sm:$0xff]
  %v546 = vld [vmem:[%s7 + $0x30] sm:$0xff]
  %v547 = vld [vmem:[%s7 + $0x38] sm:$0xff]
  %v548 = vld [vmem:[%s8] sm:$0x1]
  %v550 = vlaneseq
  %v551 = vshrl.u32 %v550, 7
  %v552 = vsub.s32 0, %v551
  %v553 = vrot.slane %v548, %v552
  %vm555 = vcmask 523264
  %v557 = vsel %vm555, %v538, 0
  %v560 = vsel %vm555, %v539, 0
  %562 = vmatprep.subr.mxu0 0.0
  %563 = vmatpush1.msra.mxu0 %v540
  %564 = vmatprep.subr.mxu0 0.0
  %565 = vmatpush1.msra.mxu0 %v541
  %566 = vmatprep.subr.mxu0 0.0
  %567 = vmatpush1.msra.mxu0 %v542
  %568 = vmatprep.subr.mxu0 0.0
  %569 = vmatpush1.msra.mxu0 %v543
  %570 = vmatprep.subr.mxu0 0.0
  %571 = vmatpush1.msra.mxu0 %v544
  %572 = vmatprep.subr.mxu0 0.0
  %573 = vmatpush1.msra.mxu0 %v545
  %574 = vmatprep.subr.mxu0 0.0
  %575 = vmatpush1.msra.mxu0 %v546
  %576 = vmatprep.subr.mxu0 0.0
  %577 = vmatpush1.msra.mxu0 %v547
  %578 = vmatprep.subr.mxu0 0.0
  %579 = vmatpush1.msra.mxu0 0.0
  %580 = vmatprep.subr.mxu0 0.0
  %581 = vmatpush1.msra.mxu0 0.0
  %582 = vmatprep.subr.mxu0 0.0
  %583 = vmatpush1.msra.mxu0 0.0
  %584 = vmatprep.subr.mxu0 0.0
  %585 = vmatpush1.msra.mxu0 0.0
  %586 = vmatprep.subr.mxu0 0.0
  %587 = vmatpush1.msra.mxu0 0.0
  %588 = vmatprep.subr.mxu0 0.0
  %589 = vmatpush1.msra.mxu0 0.0
  %590 = vmatprep.subr.mxu0 0.0
  %591 = vmatpush1.msra.mxu0 0.0
  %592 = vmatprep.subr.mxu0 0.0
  %593 = vmatpush1.msra.mxu0 0.0
  %594 = vmatprep.subr.mxu0 0.0
  %595 = vmatpush1.msra.mxu0 0.0
  %596 = vmatprep.subr.mxu0 0.0
  %597 = vmatpush1.msra.mxu0 0.0
  %598 = vmatprep.subr.mxu0 0.0
  %599 = vmatpush1.msra.mxu0 0.0
  %600 = vmatprep.subr.mxu0 0.0
  %601 = vmatpush1.msra.mxu0 0.0
  %602 = vmatprep.subr.mxu0 0.0
  %603 = vmatpush1.msra.mxu0 0.0
  %604 = vmatprep.subr.mxu0 0.0
  %605 = vmatpush1.msra.mxu0 0.0
  %606 = vmatprep.subr.mxu0 0.0
  %607 = vmatpush1.msra.mxu0 0.0
  %608 = vmatprep.subr.mxu0 0.0
  %609 = vmatpush1.msra.mxu0 0.0
  %610 = vmatprep.subr.mxu0 0.0
  %611 = vmatpush1.msra.mxu0 0.0
  %612 = vmatprep.subr.mxu0 0.0
  %613 = vmatpush1.msra.mxu0 0.0
  %614 = vmatprep.subr.mxu0 0.0
  %615 = vmatpush1.msra.mxu0 0.0
  %616 = vmatprep.subr.mxu0 0.0
  %617 = vmatpush1.msra.mxu0 0.0
  %618 = vmatprep.subr.mxu0 0.0
  %619 = vmatpush1.msra.mxu0 0.0
  %620 = vmatprep.subr.mxu0 0.0
  %621 = vmatpush1.msra.mxu0 0.0
  %622 = vmatprep.subr.mxu0 0.0
  %623 = vmatpush1.msra.mxu0 0.0
  %624 = vmatprep.subr.mxu0 0.0
  %625 = vmatpush1.msra.mxu0 0.0
  %626 = vmatprep.mubr.f32.mxu0 0.0
  %627 = vmatmul.mubr.f32.gmra.mrb[0].mxu0 %v557
  %v628 = vpop.f32.mrb[0].mxu0
  %v629 = vadd.f32 %v553, %v628
  %v630 = vpop.f32.mrb[0].mxu0
  %631 = vmatprep.mubr.f32.mxu0 0.0
  %632 = vmatmul.mubr.f32.gmra.mrb[0].mxu0 %v560
  %v633 = vpop.f32.mrb[0].mxu0
  %v634 = vadd.f32 %v553, %v633
  %v635 = vpop.f32.mrb[0].mxu0
  %636 = vdwg.mxu0
  %v637 = vmax.f32 %v629, 0.0
  %v638 = vmax.f32 %v634, 0.0
  %v639 = vld [vmem:[%s9] sm:$0xff]
  %v640 = vld [vmem:[%s9 + $0x8] sm:$0xff]
  %v641 = vld [vmem:[%s9 + $0x10] sm:$0xff]
  %v642 = vld [vmem:[%s9 + $0x18] sm:$0xff]
  %v643 = vld [vmem:[%s9 + $0x20] sm:$0xff]
  %v644 = vld [vmem:[%s9 + $0x28] sm:$0xff]
  %v645 = vld [vmem:[%s9 + $0x30] sm:$0xff]
  %v646 = vld [vmem:[%s9 + $0x38] sm:$0xff]
  %v647 = vld [vmem:[%s10] sm:$0x1]
  %v649 = vlaneseq
  %v650 = vshrl.u32 %v649, 7
  %v651 = vsub.s32 0, %v650
  %v652 = vrot.slane %v647, %v651
  %v655 = vsel %vm555, %v637, 0
  %v658 = vsel %vm555, %v638, 0
  %660 = vmatprep.subr.mxu0 0.0
  %661 = vmatpush1.msra.mxu0 %v639
  %662 = vmatprep.subr.mxu0 0.0
  %663 = vmatpush1.msra.mxu0 %v640
  %664 = vmatprep.subr.mxu0 0.0
  %665 = vmatpush1.msra.mxu0 %v641
  %666 = vmatprep.subr.mxu0 0.0
  %667 = vmatpush1.msra.mxu0 %v642
  %668 = vmatprep.subr.mxu0 0.0
  %669 = vmatpush1.msra.mxu0 %v643
  %670 = vmatprep.subr.mxu0 0.0
  %671 = vmatpush1.msra.mxu0 %v644
  %672 = vmatprep.subr.mxu0 0.0
  %673 = vmatpush1.msra.mxu0 %v645
  %674 = vmatprep.subr.mxu0 0.0
  %675 = vmatpush1.msra.mxu0 %v646
  %676 = vmatprep.subr.mxu0 0.0
  %677 = vmatpush1.msra.mxu0 0.0
  %678 = vmatprep.subr.mxu0 0.0
  %679 = vmatpush1.msra.mxu0 0.0
  %680 = vmatprep.subr.mxu0 0.0
  %681 = vmatpush1.msra.mxu0 0.0
  %682 = vmatprep.subr.mxu0 0.0
  %683 = vmatpush1.msra.mxu0 0.0
  %684 = vmatprep.subr.mxu0 0.0
  %685 = vmatpush1.msra.mxu0 0.0
  %686 = vmatprep.subr.mxu0 0.0
  %687 = vmatpush1.msra.mxu0 0.0
  %688 = vmatprep.subr.mxu0 0.0
  %689 = vmatpush1.msra.mxu0 0.0
  %690 = vmatprep.subr.mxu0 0.0
  %691 = vmatpush1.msra.mxu0 0.0
  %692 = vmatprep.subr.mxu0 0.0
  %693 = vmatpush1.msra.mxu0 0.0
  %694 = vmatprep.subr.mxu0 0.0
  %695 = vmatpush1.msra.mxu0 0.0
  %696 = vmatprep.subr.mxu0 0.0
  %697 = vmatpush1.msra.mxu0 0.0
  %698 = vmatprep.subr.mxu0 0.0
  %699 = vmatpush1.msra.mxu0 0.0
  %700 = vmatprep.subr.mxu0 0.0
  %701 = vmatpush1.msra.mxu0 0.0
  %702 = vmatprep.subr.mxu0 0.0
  %703 = vmatpush1.msra.mxu0 0.0
  %704 = vmatprep.subr.mxu0 0.0
  %705 = vmatpush1.msra.mxu0 0.0
  %706 = vmatprep.subr.mxu0 0.0
  %707 = vmatpush1.msra.mxu0 0.0
  %708 = vmatprep.subr.mxu0 0.0
  %709 = vmatpush1.msra.mxu0 0.0
  %710 = vmatprep.subr.mxu0 0.0
  %711 = vmatpush1.msra.mxu0 0.0
  %712 = vmatprep.subr.mxu0 0.0
  %713 = vmatpush1.msra.mxu0 0.0
  %714 = vmatprep.subr.mxu0 0.0
  %715 = vmatpush1.msra.mxu0 0.0
  %716 = vmatprep.subr.mxu0 0.0
  %717 = vmatpush1.msra.mxu0 0.0
  %718 = vmatprep.subr.mxu0 0.0
  %719 = vmatpush1.msra.mxu0 0.0
  %720 = vmatprep.subr.mxu0 0.0
  %721 = vmatpush1.msra.mxu0 0.0
  %722 = vmatprep.subr.mxu0 0.0
  %723 = vmatpush1.msra.mxu0 0.0
  %724 = vmatprep.mubr.f32.mxu0 0.0
  %725 = vmatmul.mubr.f32.gmra.mrb[0].mxu0 %v655
  %v726 = vpop.f32.mrb[0].mxu0
  %v727 = vadd.f32 %v652, %v726
  %v728 = vpop.f32.mrb[0].mxu0
  %729 = vmatprep.mubr.f32.mxu0 0.0
  %730 = vmatmul.mubr.f32.gmra.mrb[0].mxu0 %v658
  %v731 = vpop.f32.mrb[0].mxu0
  %v732 = vadd.f32 %v652, %v731
  %v733 = vpop.f32.mrb[0].mxu0
  %734 = vdwg.mxu0
  %v735 = vmax.f32 %v727, 0.0
  %v736 = vmax.f32 %v732, 0.0
  %v737 = vld [vmem:[%s11] sm:$0xff]
  %v738 = vld [vmem:[%s11 + $0x8] sm:$0xff]
  %v739 = vld [vmem:[%s11 + $0x10] sm:$0xff]
  %v740 = vld [vmem:[%s11 + $0x18] sm:$0xff]
  %v741 = vld [vmem:[%s11 + $0x20] sm:$0xff]
  %v742 = vld [vmem:[%s11 + $0x28] sm:$0xff]
  %v743 = vld [vmem:[%s11 + $0x30] sm:$0xff]
  %v744 = vld [vmem:[%s11 + $0x38] sm:$0xff]
  %v745 = vld [vmem:[%s12] sm:$0x1]
  %v747 = vlaneseq
  %v748 = vshrl.u32 %v747, 7
  %v749 = vsub.s32 0, %v748
  %v750 = vrot.slane %v745, %v749
  %v753 = vsel %vm555, %v735, 0
  %v756 = vsel %vm555, %v736, 0
  %758 = vmatprep.subr.mxu0 0.0
  %759 = vmatpush1.msra.mxu0 %v737
  %760 = vmatprep.subr.mxu0 0.0
  %761 = vmatpush1.msra.mxu0 %v738
  %762 = vmatprep.subr.mxu0 0.0
  %763 = vmatpush1.msra.mxu0 %v739
  %764 = vmatprep.subr.mxu0 0.0
  %765 = vmatpush1.msra.mxu0 %v740
  %766 = vmatprep.subr.mxu0 0.0
  %767 = vmatpush1.msra.mxu0 %v741
  %768 = vmatprep.subr.mxu0 0.0
  %769 = vmatpush1.msra.mxu0 %v742
  %770 = vmatprep.subr.mxu0 0.0
  %771 = vmatpush1.msra.mxu0 %v743
  %772 = vmatprep.subr.mxu0 0.0
  %773 = vmatpush1.msra.mxu0 %v744
  %774 = vmatprep.subr.mxu0 0.0
  %775 = vmatpush1.msra.mxu0 0.0
  %776 = vmatprep.subr.mxu0 0.0
  %777 = vmatpush1.msra.mxu0 0.0
  %778 = vmatprep.subr.mxu0 0.0
  %779 = vmatpush1.msra.mxu0 0.0
  %780 = vmatprep.subr.mxu0 0.0
  %781 = vmatpush1.msra.mxu0 0.0
  %782 = vmatprep.subr.mxu0 0.0
  %783 = vmatpush1.msra.mxu0 0.0
  %784 = vmatprep.subr.mxu0 0.0
  %785 = vmatpush1.msra.mxu0 0.0
  %786 = vmatprep.subr.mxu0 0.0
  %787 = vmatpush1.msra.mxu0 0.0
  %788 = vmatprep.subr.mxu0 0.0
  %789 = vmatpush1.msra.mxu0 0.0
  %790 = vmatprep.subr.mxu0 0.0
  %791 = vmatpush1.msra.mxu0 0.0
  %792 = vmatprep.subr.mxu0 0.0
  %793 = vmatpush1.msra.mxu0 0.0
  %794 = vmatprep.subr.mxu0 0.0
  %795 = vmatpush1.msra.mxu0 0.0
  %796 = vmatprep.subr.mxu0 0.0
  %797 = vmatpush1.msra.mxu0 0.0
  %798 = vmatprep.subr.mxu0 0.0
  %799 = vmatpush1.msra.mxu0 0.0
  %800 = vmatprep.subr.mxu0 0.0
  %801 = vmatpush1.msra.mxu0 0.0
  %802 = vmatprep.subr.mxu0 0.0
  %803 = vmatpush1.msra.mxu0 0.0
  %804 = vmatprep.subr.mxu0 0.0
  %805 = vmatpush1.msra.mxu0 0.0
  %806 = vmatprep.subr.mxu0 0.0
  %807 = vmatpush1.msra.mxu0 0.0
  %808 = vmatprep.subr.mxu0 0.0
  %809 = vmatpush1.msra.mxu0 0.0
  %810 = vmatprep.subr.mxu0 0.0
  %811 = vmatpush1.msra.mxu0 0.0
  %812 = vmatprep.subr.mxu0 0.0
  %813 = vmatpush1.msra.mxu0 0.0
  %814 = vmatprep.subr.mxu0 0.0
  %815 = vmatpush1.msra.mxu0 0.0
  %816 = vmatprep.subr.mxu0 0.0
  %817 = vmatpush1.msra.mxu0 0.0
  %818 = vmatprep.subr.mxu0 0.0
  %819 = vmatpush1.msra.mxu0 0.0
  %820 = vmatprep.subr.mxu0 0.0
  %821 = vmatpush1.msra.mxu0 0.0
  %822 = vmatprep.mubr.f32.mxu0 0.0
  %823 = vmatmul.mubr.f32.gmra.mrb[0].mxu0 %v753
  %v824 = vpop.f32.mrb[0].mxu0
  %v825 = vadd.f32 %v750, %v824
  %v826 = vpop.f32.mrb[0].mxu0
  %827 = vmatprep.mubr.f32.mxu0 0.0
  %828 = vmatmul.mubr.f32.gmra.mrb[0].mxu0 %v756
  %v829 = vpop.f32.mrb[0].mxu0
  %v830 = vadd.f32 %v750, %v829
  %v831 = vpop.f32.mrb[0].mxu0
  %832 = vdwg.mxu0
  %833 = vst [vmem:[%s13] sm:$0xff] %v825
  %834 = vst [vmem:[%s13 + $0x8] sm:$0xff] %v830
  // Predicated region
  $region54: #{_forward_jit.1} parent=0 // pred_check
    _
  $region55: #{_forward_jit.1} parent=0 // pred_check_branch
    %836 = sbr.rel (0) target = $region57
  $region56: #{_forward_jit.1} parent=0 // pred_region
    _
  $region57: #{_forward_jit.1} parent=0 // pred_fallthru
    _
  // Predicated region
  $region58: #{_forward_jit.1} parent=0 // pred_check
    _
  $region59: #{_forward_jit.1} parent=0 // pred_check_branch
    %838 = sbr.rel (0) target = $region61
  $region60: #{_forward_jit.1} parent=0 // pred_region
    _
  $region61: #{_forward_jit.1} parent=0 // pred_fallthru
    _

</llo_original>
